<compile_context>
chip_gen: v7x
topology: tpu7x:2x2x1
jax: 0.10.0
libtpu: 0.0.40
codegen_flags: <defaults>
</compile_context>

<pallas_src>
import functools

import jax
import jax.numpy as jnp
from jax.experimental import pallas as pl
from jax.experimental.pallas import tpu as pltpu

INPUT_SIZE = 28 * 28        # 784
HIDDEN_SIZE = 50
OUTPUT_SIZE = 10

# Padded widths used only for the VMEM-resident weights / MXU tiles.
# The HBM output stays 10-wide (no padded columns or rows in HBM).
HIDDEN_PAD = 128
OUTPUT_PAD = 128

# Default batch tile (rows). ~21 MiB VMEM footprint at f32 input; raise to
# 4096 on v6e/v7x (still inside the 48 MiB scoped budget below).
DEFAULT_TILE_M = 2048


def _round_up(n, m):
    return -(-n // m) * m


def _mlp_kernel(x_ref, w1_ref, b1_ref, w2_ref, b2_ref, o_ref):
    """relu(x @ W1 + b1) @ W2 + b2 for one batch tile, fully fused.

    x arrives in its producer dtype (f32 or bf16) and is cast to bf16
    in-kernel (no wrapper-side HBM round trip).  Both matmuls run on the
    bf16 MXU path with f32 accumulation; bias-add / ReLU on the VPU.
    The (tm, 10) store is lane-masked, but at 40 B/row vs 3.1 KB/row of
    input it is nowhere near the critical path.
    """
    x = x_ref[...].astype(jnp.bfloat16)                              # (TM, 784)
    h = jnp.dot(x, w1_ref[...], preferred_element_type=jnp.float32)  # (TM, 128)
    h = jnp.maximum(h + b1_ref[...], 0.0)
    y = jnp.dot(h.astype(jnp.bfloat16), w2_ref[...],
                preferred_element_type=jnp.float32)                  # (TM, 128)
    o_ref[...] = (y[:, :OUTPUT_SIZE] + b2_ref[...]).astype(o_ref.dtype)


def prepare_params(w1, b1, w2, b2):
    """One-time weight prep: pad hidden/output matmul dims to 128 lanes, bf16.

    Weight layout is (in_features, out_features) = PyTorch weight.T so the
    kernel computes x @ W directly.  Zero padding is mathematically inert:
    padded hidden columns see zero weights/bias; padded W2 output columns
    produce zeros that the kernel simply never stores (it slices 0:10).
    """
    w1p = (jnp.zeros((INPUT_SIZE, HIDDEN_PAD), jnp.bfloat16)
           .at[:, :HIDDEN_SIZE].set(w1.astype(jnp.bfloat16)))
    b1p = (jnp.zeros((1, HIDDEN_PAD), jnp.float32)
           .at[:, :HIDDEN_SIZE].set(b1.reshape(1, -1).astype(jnp.float32)))
    w2p = (jnp.zeros((HIDDEN_PAD, OUTPUT_PAD), jnp.bfloat16)
           .at[:HIDDEN_SIZE, :OUTPUT_SIZE].set(w2.astype(jnp.bfloat16)))
    b2p = b2.reshape(1, OUTPUT_SIZE).astype(jnp.float32)   # unpadded (1, 10)
    return w1p, b1p, w2p, b2p


@functools.partial(jax.jit, static_argnames=("tile_m",))
def mlp_forward(x, w1p, b1p, w2p, b2p, *, tile_m=DEFAULT_TILE_M):
    """x: (B, ...) -> flattened to (B, 784). Returns (B, 10) float32.

    Pass x as bf16 if the producer emits it natively: the kernel consumes it
    directly (no cast) and the dominant HBM input stream halves.
    """
    assert tile_m % 8 == 0 and tile_m >= 8
    B = x.shape[0]
    x2d = x.reshape(B, -1)            # mimics x.view(B, -1); no astype, no pad
    assert x2d.shape[1] == INPUT_SIZE, x2d.shape

    # Batch tile: multiple of 8 sublanes (16 for sub-32-bit x so packed rows
    # stay tile-aligned).  The batch itself is NOT padded: the grid is
    # ceil(B / tm) and Pallas masks the partial trailing block on the x read
    # and the output store, so garbage rows never reach HBM.
    row_align = 8 if x2d.dtype.itemsize == 4 else 16
    tm_cap = _round_up(B, row_align)
    if B >= 512:
        # Give v7x's second TensorCore work: >= 2 grid steps under
        # dimension_semantics=("parallel",).  Harmless on single-TC v5e/v6e.
        tm_cap = _round_up(-(-B // 2), row_align)
    tm = _round_up(min(tile_m, tm_cap), row_align)
    grid = (pl.cdiv(B, tm),)

    x_bytes = x2d.dtype.itemsize
    weight_bytes = (INPUT_SIZE * HIDDEN_PAD + HIDDEN_PAD * OUTPUT_PAD) * 2 \
        + HIDDEN_PAD * 4 + OUTPUT_SIZE * 4
    cost = pl.CostEstimate(
        flops=2 * B * (INPUT_SIZE * HIDDEN_PAD + HIDDEN_PAD * OUTPUT_PAD),
        transcendentals=0,
        bytes_accessed=B * (INPUT_SIZE * x_bytes + OUTPUT_SIZE * 4) + weight_bytes,
    )

    return pl.pallas_call(
        _mlp_kernel,
        out_shape=jax.ShapeDtypeStruct((B, OUTPUT_SIZE), jnp.float32),
        grid=grid,
        in_specs=[
            pl.BlockSpec((tm, INPUT_SIZE), lambda i: (i, 0)),           # x (streamed)
            pl.BlockSpec((INPUT_SIZE, HIDDEN_PAD), lambda i: (0, 0)),   # W1 resident
            pl.BlockSpec((1, HIDDEN_PAD), lambda i: (0, 0)),            # b1 resident
            pl.BlockSpec((HIDDEN_PAD, OUTPUT_PAD), lambda i: (0, 0)),   # W2 resident
            pl.BlockSpec((1, OUTPUT_SIZE), lambda i: (0, 0)),           # b2 resident
        ],
        out_specs=pl.BlockSpec((tm, OUTPUT_SIZE), lambda i: (i, 0)),    # (B, 10) direct
        compiler_params=pltpu.CompilerParams(
            dimension_semantics=("parallel",),   # batch tiles across TCs on v7x
            # Explicit VMEM budget: v5e's 16 MiB scoped default would reject
            # tm=2048; 48 MiB covers tile_m up to ~4096 at f32 input and stays
            # under v7x's 64 MiB/TC physical VMEM (v5e/v6e have 128 MiB).
            vmem_limit_bytes=48 << 20,
        ),
        cost_estimate=cost,
    )(x2d, w1p, b1p, w2p, b2p)


def init_params(key):
    """Deterministic init mirroring nn.Linear's U(-1/sqrt(fan_in), +).

    Weights stored as (in_features, out_features) — PyTorch's weight.T.
    """
    k1, k2, k3, k4 = jax.random.split(key, 4)
    lim1 = 1.0 / jnp.sqrt(float(INPUT_SIZE))
    lim2 = 1.0 / jnp.sqrt(float(HIDDEN_SIZE))
    w1 = jax.random.uniform(k1, (INPUT_SIZE, HIDDEN_SIZE), jnp.float32, -lim1, lim1)
    b1 = jax.random.uniform(k2, (HIDDEN_SIZE,), jnp.float32, -lim1, lim1)
    w2 = jax.random.uniform(k3, (HIDDEN_SIZE, OUTPUT_SIZE), jnp.float32, -lim2, lim2)
    b2 = jax.random.uniform(k4, (OUTPUT_SIZE,), jnp.float32, -lim2, lim2)
    return w1, b1, w2, b2


if __name__ == "__main__":
    key = jax.random.PRNGKey(0)
    pkey, xkey = jax.random.split(key)
    w1, b1, w2, b2 = init_params(pkey)
    w1p, b1p, w2p, b2p = prepare_params(w1, b1, w2, b2)

    # Small MNIST-like batch (NCHW like PyTorch).  B=13 with tile_m=8 gives
    # grid=2 with a masked partial trailing block — exercises the no-pad path.
    B = 13
    x = jax.random.normal(xkey, (B, 1, 28, 28), jnp.float32)

    out = jax.block_until_ready(mlp_forward(x, w1p, b1p, w2p, b2p, tile_m=8))

    # Plain-JAX reference of the same bf16-input / f32-accum math.
    x2d = x.reshape(B, -1)
    h_ref = jnp.maximum(
        jnp.dot(x2d.astype(jnp.bfloat16), w1.astype(jnp.bfloat16),
                preferred_element_type=jnp.float32) + b1, 0.0)
    ref = jnp.dot(h_ref.astype(jnp.bfloat16), w2.astype(jnp.bfloat16),
                  preferred_element_type=jnp.float32) + b2

    assert out.shape == (B, OUTPUT_SIZE) and out.dtype == jnp.float32, out.shape
    assert jnp.allclose(out, ref, atol=2e-2, rtol=2e-2), "mismatch vs reference"

    # Native-bf16-input fast path (producer emits bf16; no in-wrapper cast).
    out_bf16_in = jax.block_until_ready(
        mlp_forward(x.astype(jnp.bfloat16), w1p, b1p, w2p, b2p, tile_m=16))
    assert jnp.allclose(out_bf16_in, ref, atol=5e-2, rtol=5e-2), "bf16-x mismatch"

    print("KERNEL_OK")
</pallas_src>

<mosaic_0001>
module attributes {stable_mosaic.version = 11 : i64} {
  func.func @_mlp_kernel(%arg0: i32, %arg1: memref<8x784xf32, #tpu.memory_space<vmem>>, %arg2: memref<784x128xbf16, #tpu.memory_space<vmem>>, %arg3: memref<1x128xf32, #tpu.memory_space<vmem>>, %arg4: memref<128x128xbf16, #tpu.memory_space<vmem>>, %arg5: memref<1x10xf32, #tpu.memory_space<vmem>>, %arg6: memref<8x10xf32, #tpu.memory_space<vmem>>) attributes {dimension_semantics = [#tpu.dimension_semantics<parallel>], iteration_bounds = array<i64: 2>, scalar_prefetch = 0 : i64, scratch_operands = 0 : i64, tpu.core_type = #tpu.core_type<tc>, window_params = [{transform_indices = @transform_0, window_bounds = array<i64: 8, 784>}, {pipeline_mode = #tpu.pipeline_mode<synchronous>, transform_indices = @transform_1, window_bounds = array<i64: 784, 128>}, {pipeline_mode = #tpu.pipeline_mode<synchronous>, transform_indices = @transform_2, window_bounds = array<i64: 1, 128>}, {pipeline_mode = #tpu.pipeline_mode<synchronous>, transform_indices = @transform_3, window_bounds = array<i64: 128, 128>}, {pipeline_mode = #tpu.pipeline_mode<synchronous>, transform_indices = @transform_4, window_bounds = array<i64: 1, 10>}, {transform_indices = @transform_5, window_bounds = array<i64: 8, 10>}]} {
    %c0 = arith.constant 0 : index
    %c0_0 = arith.constant 0 : index
    %0 = vector.load %arg1[%c0, %c0_0] : memref<8x784xf32, #tpu.memory_space<vmem>>, vector<8x784xf32>
    %1 = arith.truncf %0 : vector<8x784xf32> to vector<8x784xbf16>
    %c0_1 = arith.constant 0 : index
    %c0_2 = arith.constant 0 : index
    %2 = vector.load %arg2[%c0_1, %c0_2] : memref<784x128xbf16, #tpu.memory_space<vmem>>, vector<784x128xbf16>
    %cst = arith.constant dense<0.000000e+00> : vector<8x128xf32>
    %3 = tpu.matmul %1, %2, %cst {dimension_numbers = #tpu.dot_dimension_numbers<[1], [0], [0], [1], [0, 0, 1, 1], [], []>} : vector<8x784xbf16>, vector<784x128xbf16>, vector<8x128xf32> -> vector<8x128xf32>
    %c0_3 = arith.constant 0 : index
    %c0_4 = arith.constant 0 : index
    %4 = vector.load %arg3[%c0_3, %c0_4] : memref<1x128xf32, #tpu.memory_space<vmem>>, vector<1x128xf32>
    %5 = vector.broadcast %4 : vector<1x128xf32> to vector<8x128xf32>
    %6 = arith.addf %3, %5 : vector<8x128xf32>
    %cst_5 = arith.constant 0.000000e+00 : f32
    %7 = vector.broadcast %cst_5 : f32 to vector<8x128xf32>
    %8 = arith.maximumf %6, %7 : vector<8x128xf32>
    %9 = arith.truncf %8 : vector<8x128xf32> to vector<8x128xbf16>
    %c0_6 = arith.constant 0 : index
    %c0_7 = arith.constant 0 : index
    %10 = vector.load %arg4[%c0_6, %c0_7] : memref<128x128xbf16, #tpu.memory_space<vmem>>, vector<128x128xbf16>
    %cst_8 = arith.constant dense<0.000000e+00> : vector<8x128xf32>
    %11 = tpu.matmul %9, %10, %cst_8 {dimension_numbers = #tpu.dot_dimension_numbers<[1], [0], [0], [1], [0, 0, 1, 1], [], []>} : vector<8x128xbf16>, vector<128x128xbf16>, vector<8x128xf32> -> vector<8x128xf32>
    %12 = vector.extract_strided_slice %11 {offsets = [0, 0], sizes = [8, 10], strides = [1, 1]} : vector<8x128xf32> to vector<8x10xf32>
    %c0_9 = arith.constant 0 : index
    %c0_10 = arith.constant 0 : index
    %13 = vector.load %arg5[%c0_9, %c0_10] : memref<1x10xf32, #tpu.memory_space<vmem>>, vector<1x10xf32>
    %14 = vector.broadcast %13 : vector<1x10xf32> to vector<8x10xf32>
    %15 = arith.addf %12, %14 : vector<8x10xf32>
    %c0_11 = arith.constant 0 : index
    %c0_12 = arith.constant 0 : index
    %16 = vector.load %arg6[%c0_11, %c0_12] : memref<8x10xf32, #tpu.memory_space<vmem>>, vector<8x10xf32>
    tpu.vector_store %arg6[%c0_11, %c0_12], %15 {strides = array<i32>} : memref<8x10xf32, #tpu.memory_space<vmem>>, vector<8x10xf32>,
    return
  }
  func.func @transform_0(%arg0: i32) -> (i32, i32) {
    %c0_i32 = arith.constant 0 : i32
    %c0_i32_0 = arith.constant 0 : i32
    return %arg0, %c0_i32 : i32, i32
  }
  func.func @transform_1(%arg0: i32) -> (i32, i32) {
    %c0_i32 = arith.constant 0 : i32
    %c0_i32_0 = arith.constant 0 : i32
    %c0_i32_1 = arith.constant 0 : i32
    return %c0_i32, %c0_i32_0 : i32, i32
  }
  func.func @transform_2(%arg0: i32) -> (i32, i32) {
    %c0_i32 = arith.constant 0 : i32
    %c0_i32_0 = arith.constant 0 : i32
    %c0_i32_1 = arith.constant 0 : i32
    return %c0_i32, %c0_i32_0 : i32, i32
  }
  func.func @transform_3(%arg0: i32) -> (i32, i32) {
    %c0_i32 = arith.constant 0 : i32
    %c0_i32_0 = arith.constant 0 : i32
    %c0_i32_1 = arith.constant 0 : i32
    return %c0_i32, %c0_i32_0 : i32, i32
  }
  func.func @transform_4(%arg0: i32) -> (i32, i32) {
    %c0_i32 = arith.constant 0 : i32
    %c0_i32_0 = arith.constant 0 : i32
    %c0_i32_1 = arith.constant 0 : i32
    return %c0_i32, %c0_i32_0 : i32, i32
  }
  func.func @transform_5(%arg0: i32) -> (i32, i32) {
    %c0_i32 = arith.constant 0 : i32
    %c0_i32_0 = arith.constant 0 : i32
    return %arg0, %c0_i32 : i32, i32
  }
}

</mosaic_0001>

<llo_original>
// kernel: mlp_forward.1
$region0: #{mlp_forward.1}
  #allocation0 [shape = 'u32[]', space=smem, size = 0x4, offset = 0x4, fixed_abs, tag = 'smem constant byte address 0x4 - core index']
  #allocation1 [shape = 'u32[144,128]{1,0:T(1,128)}', space=vmem, size = 0x12000, scoped, tag = 'internal scratch']
  %s0 = inlined_call_operand.vmem [shape: f32[13,784], index: 0, kind: input, shape index: {}]
  %s1 = inlined_call_operand.vmem [shape: bf16[784,128], index: 1, kind: input, shape index: {}]
  %s2 = inlined_call_operand.vmem [shape: f32[1,128], index: 2, kind: input, shape index: {}]
  %s3 = inlined_call_operand.vmem [shape: bf16[128,128], index: 3, kind: input, shape index: {}]
  %s4 = inlined_call_operand.vmem [shape: f32[1,10], index: 4, kind: input, shape index: {}]
  %s5 = inlined_call_operand.hbm [shape: f32[13,10], index: 5, kind: output, shape index: {}]
  %s6 = sld [smem:[#allocation0]]
  $region53: #{mlp_forward.1} parent=0
    _
  %s8 = ssub.s32 1, %s6
  %s9 = scalar_select 0, %s8, %s6
  $region1: #{mlp_forward.1} parent=0
    #allocation2 [shape = 'u8[8192]{0}', space=vmem, size = 0x2000, scoped, tag = 'output window, operand 0']
    #allocation3 [shape = 's32[2]{0}', space=sflag, size = 0x8, scoped, tag = 'scoped memory for mlp_forward.1']
    %10 = vsyncpa [#allocation3], 0
    %s11 = scalar_lea.sflag [#allocation3], 1
    %12 = vsyncpa %s11, 0
    loop: start=0, step=1, limit=4
    $region2: #{mlp_forward.1} parent=1 // loop_pre_header
      _
    $region3: #{mlp_forward.1} parent=1 // loop_header
      %s14 = sphi 0, %s18
      %p15 = scmp.ge.s32.totalorder %s14, 4
      %s24 = sphi 0, %s26
      %s27 = sphi 0, %s24
      %s28 = sphi 0, %s27
      %s44 = sphi 0, %s28
      %s48 = sphi 0, %s48
      %s50 = sphi 0, %s48
      %s51 = sphi 0, %s50
      %s65 = sphi 0, %s51
      %s69 = sphi 0, %s69
      %s71 = sphi 0, %s69
      %s72 = sphi 0, %s71
      %s86 = sphi 0, %s72
      %s90 = sphi 0, %s90
      %s92 = sphi 0, %s90
      %s93 = sphi 0, %s92
      %s107 = sphi 0, %s93
      %s111 = sphi 0, %s111
      %s113 = sphi 0, %s111
      %s114 = sphi 0, %s113
      %s128 = sphi 0, %s114
      %s134 = sphi 0, %s136
      %s137 = sphi 0, %s134
      %s138 = sphi 0, %s137
      %s154 = sphi 0, %s138
    $region4: #{mlp_forward.1} parent=1 // loop_header_branch
      %17 = sbr.rel (%p15) target = $region8
    $region5: #{mlp_forward.1} parent=1 // loop_body
      %s19 = ssub.s32 %s14, 1
      %s20 = ssub.s32 %s14, 2
      %s21 = sadd.s32 %s14, 1
      %s22 = ssub.s32 %s14, %s21
      %p23 = scmp.eq.s32.totalorder %s22, 0
      %s25 = sadd.s32 %s24, 1
      %s26 = scalar_select %p23, %s24, %s25
      %p29 = pneg %p23
      %p30 = scmp.eq.s32.totalorder %s14, 1
      %p31 = por %p29, %p30
      %p32 = scmp.ne.s32.totalorder %s24, %s27
      %p33 = scmp.eq.s32.totalorder %s14, 0
      %p34 = por %p32, %p33
      %p35 = scmp.ne.s32.totalorder %s24, %s27
      %p36 = scmp.eq.s32.totalorder %s19, 1
      %p37 = por %p35, %p36
      %p38 = scmp.ne.s32.totalorder %s27, %s28
      %p39 = scmp.eq.s32.totalorder %s19, 0
      %p40 = por %p38, %p39
      %p41 = scmp.ne.s32.totalorder %s27, %s28
      %p42 = scmp.eq.s32.totalorder %s20, 1
      %p43 = por %p41, %p42
      %p45 = scmp.ne.s32.totalorder %s28, %s44
      %p46 = scmp.eq.s32.totalorder %s20, 0
      %p47 = por %p45, %p46
      %s49 = sadd.s32 %s48, 1
      %p52 = scmp.eq.s32.totalorder %s14, 1
      %p53 = scmp.ne.s32.totalorder %s48, %s50
      %p54 = scmp.eq.s32.totalorder %s14, 0
      %p55 = por %p53, %p54
      %p56 = scmp.ne.s32.totalorder %s48, %s50
      %p57 = scmp.eq.s32.totalorder %s19, 1
      %p58 = por %p56, %p57
      %p59 = scmp.ne.s32.totalorder %s50, %s51
      %p60 = scmp.eq.s32.totalorder %s19, 0
      %p61 = por %p59, %p60
      %p62 = scmp.ne.s32.totalorder %s50, %s51
      %p63 = scmp.eq.s32.totalorder %s20, 1
      %p64 = por %p62, %p63
      %p66 = scmp.ne.s32.totalorder %s51, %s65
      %p67 = scmp.eq.s32.totalorder %s20, 0
      %p68 = por %p66, %p67
      %s70 = sadd.s32 %s69, 1
      %p73 = scmp.eq.s32.totalorder %s14, 1
      %p74 = scmp.ne.s32.totalorder %s69, %s71
      %p75 = scmp.eq.s32.totalorder %s14, 0
      %p76 = por %p74, %p75
      %p77 = scmp.ne.s32.totalorder %s69, %s71
      %p78 = scmp.eq.s32.totalorder %s19, 1
      %p79 = por %p77, %p78
      %p80 = scmp.ne.s32.totalorder %s71, %s72
      %p81 = scmp.eq.s32.totalorder %s19, 0
      %p82 = por %p80, %p81
      %p83 = scmp.ne.s32.totalorder %s71, %s72
      %p84 = scmp.eq.s32.totalorder %s20, 1
      %p85 = por %p83, %p84
      %p87 = scmp.ne.s32.totalorder %s72, %s86
      %p88 = scmp.eq.s32.totalorder %s20, 0
      %p89 = por %p87, %p88
      %s91 = sadd.s32 %s90, 1
      %p94 = scmp.eq.s32.totalorder %s14, 1
      %p95 = scmp.ne.s32.totalorder %s90, %s92
      %p96 = scmp.eq.s32.totalorder %s14, 0
      %p97 = por %p95, %p96
      %p98 = scmp.ne.s32.totalorder %s90, %s92
      %p99 = scmp.eq.s32.totalorder %s19, 1
      %p100 = por %p98, %p99
      %p101 = scmp.ne.s32.totalorder %s92, %s93
      %p102 = scmp.eq.s32.totalorder %s19, 0
      %p103 = por %p101, %p102
      %p104 = scmp.ne.s32.totalorder %s92, %s93
      %p105 = scmp.eq.s32.totalorder %s20, 1
      %p106 = por %p104, %p105
      %p108 = scmp.ne.s32.totalorder %s93, %s107
      %p109 = scmp.eq.s32.totalorder %s20, 0
      %p110 = por %p108, %p109
      %s112 = sadd.s32 %s111, 1
      %p115 = scmp.eq.s32.totalorder %s14, 1
      %p116 = scmp.ne.s32.totalorder %s111, %s113
      %p117 = scmp.eq.s32.totalorder %s14, 0
      %p118 = por %p116, %p117
      %p119 = scmp.ne.s32.totalorder %s111, %s113
      %p120 = scmp.eq.s32.totalorder %s19, 1
      %p121 = por %p119, %p120
      %p122 = scmp.ne.s32.totalorder %s113, %s114
      %p123 = scmp.eq.s32.totalorder %s19, 0
      %p124 = por %p122, %p123
      %p125 = scmp.ne.s32.totalorder %s113, %s114
      %p126 = scmp.eq.s32.totalorder %s20, 1
      %p127 = por %p125, %p126
      %p129 = scmp.ne.s32.totalorder %s114, %s128
      %p130 = scmp.eq.s32.totalorder %s20, 0
      %p131 = por %p129, %p130
      %s132 = ssub.s32 %s14, %s21
      %p133 = scmp.eq.s32.totalorder %s132, 0
      %s135 = sadd.s32 %s134, 1
      %s136 = scalar_select %p133, %s134, %s135
      %p139 = pneg %p133
      %p140 = scmp.eq.s32.totalorder %s14, 1
      %p141 = por %p139, %p140
      %p142 = scmp.ne.s32.totalorder %s134, %s137
      %p143 = scmp.eq.s32.totalorder %s14, 0
      %p144 = por %p142, %p143
      %p145 = scmp.ne.s32.totalorder %s134, %s137
      %p146 = scmp.eq.s32.totalorder %s19, 1
      %p147 = por %p145, %p146
      %p148 = scmp.ne.s32.totalorder %s137, %s138
      %p149 = scmp.eq.s32.totalorder %s19, 0
      %p150 = por %p148, %p149
      %p151 = scmp.ne.s32.totalorder %s137, %s138
      %p152 = scmp.eq.s32.totalorder %s20, 1
      %p153 = por %p151, %p152
      %p155 = scmp.ne.s32.totalorder %s138, %s154
      %p156 = scmp.eq.s32.totalorder %s20, 0
      %p157 = por %p155, %p156
      %p158 = scmp.le.s32.totalorder 1, %s14
      %p159 = scmp.lt.s32.totalorder %s14, 3
      %p160 = pnand %p158, %p159
      %p161 = pneg %p160
      // Predicated region
      $region9: #{mlp_forward.1} parent=5 // pred_check
        _
      $region10: #{mlp_forward.1} parent=5 // pred_check_branch
        %163 = sbr.rel (%p160) target = $region12
      $region11: #{mlp_forward.1} parent=5 // pred_region
        %s164 = ssub.s32 %s14, 1
        // Predicated region
        $region13: #{mlp_forward.1} parent=11 // pred_check
          %p165 = pneg %p61
        $region14: #{mlp_forward.1} parent=11 // pred_check_branch
          %167 = sbr.rel (%p165) target = $region16
        $region15: #{mlp_forward.1} parent=11 // pred_region
          _
        $region16: #{mlp_forward.1} parent=11 // pred_fallthru
          _
        // Predicated region
        $region17: #{mlp_forward.1} parent=11 // pred_check
          %p168 = pneg %p82
        $region18: #{mlp_forward.1} parent=11 // pred_check_branch
          %170 = sbr.rel (%p168) target = $region20
        $region19: #{mlp_forward.1} parent=11 // pred_region
          _
        $region20: #{mlp_forward.1} parent=11 // pred_fallthru
          _
        // Predicated region
        $region21: #{mlp_forward.1} parent=11 // pred_check
          %p171 = pneg %p103
        $region22: #{mlp_forward.1} parent=11 // pred_check_branch
          %173 = sbr.rel (%p171) target = $region24
        $region23: #{mlp_forward.1} parent=11 // pred_region
          _
        $region24: #{mlp_forward.1} parent=11 // pred_fallthru
          _
        // Predicated region
        $region25: #{mlp_forward.1} parent=11 // pred_check
          %p174 = pneg %p124
        $region26: #{mlp_forward.1} parent=11 // pred_check_branch
          %176 = sbr.rel (%p174) target = $region28
        $region27: #{mlp_forward.1} parent=11 // pred_region
          _
        $region28: #{mlp_forward.1} parent=11 // pred_fallthru
          _
      $region12: #{mlp_forward.1} parent=5 // pred_fallthru
        _
      %p177 = scmp.lt.s32.totalorder %s14, 2
      // Predicated region
      $region29: #{mlp_forward.1} parent=5 // pred_check
        %p178 = pneg %p177
      $region30: #{mlp_forward.1} parent=5 // pred_check_branch
        %180 = sbr.rel (%p178) target = $region32
      $region31: #{mlp_forward.1} parent=5 // pred_region
        // Predicated region
        $region33: #{mlp_forward.1} parent=31 // pred_check
          %p181 = pneg %p34
        $region34: #{mlp_forward.1} parent=31 // pred_check_branch
          %183 = sbr.rel (%p181) target = $region36
        $region35: #{mlp_forward.1} parent=31 // pred_region
          %p184 = scmp.lt.s32.totalorder %s14, 1
          %s185 = scalar_select %p184, %s14, 1
          %s186 = smul.addr %s185, 7
          %s187 = smul.addr %s186, 8
          %s188 = scalar_lea.vmem %s0, %s187
        $region36: #{mlp_forward.1} parent=31 // pred_fallthru
          _
      $region32: #{mlp_forward.1} parent=5 // pred_fallthru
        _
      %p189 = scmp.le.s32.totalorder 1, %s14
      %p190 = scmp.lt.s32.totalorder %s14, 3
      %p191 = pnand %p189, %p190
      %p192 = pneg %p191
      // Predicated region
      $region37: #{mlp_forward.1} parent=5 // pred_check
        _
      $region38: #{mlp_forward.1} parent=5 // pred_check_branch
        %194 = sbr.rel (%p191) target = $region40
      $region39: #{mlp_forward.1} parent=5 // pred_region
        %s195 = ssub.s32 %s14, 1
        %p196 = scmp.lt.s32.totalorder %s19, 1
        %s197 = scalar_select %p196, %s19, 1
        %s198 = smul.addr %s197, 7
        %s199 = smul.addr %s198, 8
        %s200 = scalar_lea.vmem %s0, %s199
        %p201 = pneg %p40
        %p202 = pneg %p37
        %p203 = pneg %p61
        %p204 = pneg %p58
        %p205 = pneg %p82
        %p206 = pneg %p79
        %p207 = pneg %p103
        %p208 = pneg %p100
        %p209 = pneg %p124
        %p210 = pneg %p121
        %p211 = pneg %p150
        %p212 = pneg %p147
        %s213 = sand.u32 %s137, 1
        %s214 = scalar_lea.sflag [#allocation3], %s213
        %s215 = sand.u32 %s137, 1
        %s216 = smul.addr %s215, 8
        %s217 = scalar_lea.vmem [#allocation2], %s216
        %p218 = scmp.lt.s32.totalorder %s19, 1
        %s219 = scalar_select %p218, %s19, 1
        %s220 = smul.addr %s219, 7
        %s221 = smul.addr %s220, 8
        %s222 = scalar_lea.vmem %s0, %s221
        %v224 = vld [vmem:[%s222] sm:$0xff]
        %v225 = vld [vmem:[%s222 + $0x8] sm:$0xff]
        %v226 = vld [vmem:[%s222 + $0x10] sm:$0xff]
        %v227 = vld [vmem:[%s222 + $0x18] sm:$0xff]
        %v228 = vld [vmem:[%s222 + $0x20] sm:$0xff]
        %v229 = vld [vmem:[%s222 + $0x28] sm:$0xff]
        %v230 = vld [vmem:[%s222 + $0x30] sm:$0xff]
        %v231 = vpack.c.bf16 %v224, %v224
        %v232 = vpack.c.bf16 %v225, %v225
        %v233 = vpack.c.bf16 %v226, %v226
        %v234 = vpack.c.bf16 %v227, %v227
        %v235 = vpack.c.bf16 %v228, %v228
        %v236 = vpack.c.bf16 %v229, %v229
        %v237 = vpack.c.bf16 %v230, %v230
        %v238 = vld [vmem:[%s1] sm:$0xf]
        %v239 = vld [vmem:[%s1 + $0x4] sm:$0xf]
        %v240 = vld [vmem:[%s1 + $0x8] sm:$0xf]
        %v241 = vld [vmem:[%s1 + $0xc] sm:$0xf]
        %v242 = vld [vmem:[%s1 + $0x10] sm:$0xf]
        %v243 = vld [vmem:[%s1 + $0x14] sm:$0xf]
        %v244 = vld [vmem:[%s1 + $0x18] sm:$0xf]
        %v245 = vld [vmem:[%s1 + $0x1c] sm:$0xf]
        %v246 = vld [vmem:[%s1 + $0x20] sm:$0xf]
        %v247 = vld [vmem:[%s1 + $0x24] sm:$0xf]
        %v248 = vld [vmem:[%s1 + $0x28] sm:$0xf]
        %v249 = vld [vmem:[%s1 + $0x2c] sm:$0xf]
        %v250 = vld [vmem:[%s1 + $0x30] sm:$0xf]
        %v251 = vld [vmem:[%s1 + $0x34] sm:$0xf]
        %v252 = vld [vmem:[%s1 + $0x38] sm:$0xf]
        %v253 = vld [vmem:[%s1 + $0x3c] sm:$0xf]
        %v254 = vld [vmem:[%s1 + $0x40] sm:$0xf]
        %v255 = vld [vmem:[%s1 + $0x44] sm:$0xf]
        %v256 = vld [vmem:[%s1 + $0x48] sm:$0xf]
        %v257 = vld [vmem:[%s1 + $0x4c] sm:$0xf]
        %v258 = vld [vmem:[%s1 + $0x50] sm:$0xf]
        %v259 = vld [vmem:[%s1 + $0x54] sm:$0xf]
        %v260 = vld [vmem:[%s1 + $0x58] sm:$0xf]
        %v261 = vld [vmem:[%s1 + $0x5c] sm:$0xf]
        %v262 = vld [vmem:[%s1 + $0x60] sm:$0xf]
        %v263 = vld [vmem:[%s1 + $0x64] sm:$0xf]
        %v264 = vld [vmem:[%s1 + $0x68] sm:$0xf]
        %v265 = vld [vmem:[%s1 + $0x6c] sm:$0xf]
        %v266 = vld [vmem:[%s1 + $0x70] sm:$0xf]
        %v267 = vld [vmem:[%s1 + $0x74] sm:$0xf]
        %v268 = vld [vmem:[%s1 + $0x78] sm:$0xf]
        %v269 = vld [vmem:[%s1 + $0x7c] sm:$0xf]
        %v270 = vld [vmem:[%s1 + $0x80] sm:$0xf]
        %v271 = vld [vmem:[%s1 + $0x84] sm:$0xf]
        %v272 = vld [vmem:[%s1 + $0x88] sm:$0xf]
        %v273 = vld [vmem:[%s1 + $0x8c] sm:$0xf]
        %v274 = vld [vmem:[%s1 + $0x90] sm:$0xf]
        %v275 = vld [vmem:[%s1 + $0x94] sm:$0xf]
        %v276 = vld [vmem:[%s1 + $0x98] sm:$0xf]
        %v277 = vld [vmem:[%s1 + $0x9c] sm:$0xf]
        %v278 = vld [vmem:[%s1 + $0xa0] sm:$0xf]
        %v279 = vld [vmem:[%s1 + $0xa4] sm:$0xf]
        %v280 = vld [vmem:[%s1 + $0xa8] sm:$0xf]
        %v281 = vld [vmem:[%s1 + $0xac] sm:$0xf]
        %v282 = vld [vmem:[%s1 + $0xb0] sm:$0xf]
        %v283 = vld [vmem:[%s1 + $0xb4] sm:$0xf]
        %v284 = vld [vmem:[%s1 + $0xb8] sm:$0xf]
        %v285 = vld [vmem:[%s1 + $0xbc] sm:$0xf]
        %v286 = vld [vmem:[%s1 + $0xc0] sm:$0xf]
        %v287 = vld [vmem:[%s1 + $0xc4] sm:$0xf]
        %v288 = vld [vmem:[%s1 + $0xc8] sm:$0xf]
        %v289 = vld [vmem:[%s1 + $0xcc] sm:$0xf]
        %v290 = vld [vmem:[%s1 + $0xd0] sm:$0xf]
        %v291 = vld [vmem:[%s1 + $0xd4] sm:$0xf]
        %v292 = vld [vmem:[%s1 + $0xd8] sm:$0xf]
        %v293 = vld [vmem:[%s1 + $0xdc] sm:$0xf]
        %v294 = vld [vmem:[%s1 + $0xe0] sm:$0xf]
        %v295 = vld [vmem:[%s1 + $0xe4] sm:$0xf]
        %v296 = vld [vmem:[%s1 + $0xe8] sm:$0xf]
        %v297 = vld [vmem:[%s1 + $0xec] sm:$0xf]
        %v298 = vld [vmem:[%s1 + $0xf0] sm:$0xf]
        %v299 = vld [vmem:[%s1 + $0xf4] sm:$0xf]
        %v300 = vld [vmem:[%s1 + $0xf8] sm:$0xf]
        %v301 = vld [vmem:[%s1 + $0xfc] sm:$0xf]
        %v302 = vld [vmem:[%s1 + $0x100] sm:$0xf]
        %v303 = vld [vmem:[%s1 + $0x104] sm:$0xf]
        %v304 = vld [vmem:[%s1 + $0x108] sm:$0xf]
        %v305 = vld [vmem:[%s1 + $0x10c] sm:$0xf]
        %v306 = vld [vmem:[%s1 + $0x110] sm:$0xf]
        %v307 = vld [vmem:[%s1 + $0x114] sm:$0xf]
        %v308 = vld [vmem:[%s1 + $0x118] sm:$0xf]
        %v309 = vld [vmem:[%s1 + $0x11c] sm:$0xf]
        %v310 = vld [vmem:[%s1 + $0x120] sm:$0xf]
        %v311 = vld [vmem:[%s1 + $0x124] sm:$0xf]
        %v312 = vld [vmem:[%s1 + $0x128] sm:$0xf]
        %v313 = vld [vmem:[%s1 + $0x12c] sm:$0xf]
        %v314 = vld [vmem:[%s1 + $0x130] sm:$0xf]
        %v315 = vld [vmem:[%s1 + $0x134] sm:$0xf]
        %v316 = vld [vmem:[%s1 + $0x138] sm:$0xf]
        %v317 = vld [vmem:[%s1 + $0x13c] sm:$0xf]
        %v318 = vld [vmem:[%s1 + $0x140] sm:$0xf]
        %v319 = vld [vmem:[%s1 + $0x144] sm:$0xf]
        %v320 = vld [vmem:[%s1 + $0x148] sm:$0xf]
        %v321 = vld [vmem:[%s1 + $0x14c] sm:$0xf]
        %v322 = vld [vmem:[%s1 + $0x150] sm:$0xf]
        %v323 = vld [vmem:[%s1 + $0x154] sm:$0xf]
        %v324 = vld [vmem:[%s1 + $0x158] sm:$0xf]
        %v325 = vld [vmem:[%s1 + $0x15c] sm:$0xf]
        %v326 = vld [vmem:[%s1 + $0x160] sm:$0xf]
        %v327 = vld [vmem:[%s1 + $0x164] sm:$0xf]
        %v328 = vld [vmem:[%s1 + $0x168] sm:$0xf]
        %v329 = vld [vmem:[%s1 + $0x16c] sm:$0xf]
        %v330 = vld [vmem:[%s1 + $0x170] sm:$0xf]
        %v331 = vld [vmem:[%s1 + $0x174] sm:$0xf]
        %v332 = vld [vmem:[%s1 + $0x178] sm:$0xf]
        %v333 = vld [vmem:[%s1 + $0x17c] sm:$0xf]
        %v334 = vld [vmem:[%s1 + $0x180] sm:$0xf]
        %v335 = vld [vmem:[%s1 + $0x184] sm:$0xf]
        %v336 = vld [vmem:[%s2] sm:$0x1]
        %v338 = vlaneseq
        %v339 = vshrl.u32 %v338, 7
        %v340 = vsub.s32 0, %v339
        %v341 = vrot.slane %v336, %v340
        %v441 = vunpack.c.l.b16 %v238
        %v442 = vunpack.c.l.b16 %v239
        %v443 = vunpack.c.l.b16 %v240
        %v444 = vunpack.c.l.b16 %v241
        %v445 = vunpack.c.l.b16 %v242
        %v446 = vunpack.c.l.b16 %v243
        %v447 = vunpack.c.l.b16 %v244
        %v448 = vunpack.c.l.b16 %v245
        %v449 = vunpack.c.l.b16 %v246
        %v450 = vunpack.c.l.b16 %v247
        %v451 = vunpack.c.l.b16 %v248
        %v452 = vunpack.c.l.b16 %v249
        %v453 = vunpack.c.l.b16 %v250
        %v454 = vunpack.c.l.b16 %v251
        %v455 = vunpack.c.l.b16 %v252
        %v456 = vunpack.c.l.b16 %v253
        %v457 = vunpack.c.l.b16 %v254
        %v458 = vunpack.c.l.b16 %v255
        %v459 = vunpack.c.l.b16 %v256
        %v460 = vunpack.c.l.b16 %v257
        %v461 = vunpack.c.l.b16 %v258
        %v462 = vunpack.c.l.b16 %v259
        %v463 = vunpack.c.l.b16 %v260
        %v464 = vunpack.c.l.b16 %v261
        %v465 = vunpack.c.l.b16 %v262
        %v466 = vunpack.c.l.b16 %v263
        %v467 = vunpack.c.l.b16 %v264
        %v468 = vunpack.c.l.b16 %v265
        %v469 = vunpack.c.l.b16 %v266
        %v470 = vunpack.c.l.b16 %v267
        %v471 = vunpack.c.l.b16 %v268
        %v472 = vunpack.c.l.b16 %v269
        %v473 = vunpack.c.l.b16 %v270
        %v474 = vunpack.c.l.b16 %v271
        %v475 = vunpack.c.l.b16 %v272
        %v476 = vunpack.c.l.b16 %v273
        %v477 = vunpack.c.l.b16 %v274
        %v478 = vunpack.c.l.b16 %v275
        %v479 = vunpack.c.l.b16 %v276
        %v480 = vunpack.c.l.b16 %v277
        %v481 = vunpack.c.l.b16 %v278
        %v482 = vunpack.c.l.b16 %v279
        %v483 = vunpack.c.l.b16 %v280
        %v484 = vunpack.c.l.b16 %v281
        %v485 = vunpack.c.l.b16 %v282
        %v486 = vunpack.c.l.b16 %v283
        %v487 = vunpack.c.l.b16 %v284
        %v488 = vunpack.c.l.b16 %v285
        %v489 = vunpack.c.l.b16 %v286
        %v490 = vunpack.c.l.b16 %v287
        %v491 = vunpack.c.l.b16 %v288
        %v492 = vunpack.c.l.b16 %v289
        %v493 = vunpack.c.l.b16 %v290
        %v494 = vunpack.c.l.b16 %v291
        %v495 = vunpack.c.l.b16 %v292
        %v496 = vunpack.c.l.b16 %v293
        %v497 = vunpack.c.l.b16 %v294
        %v498 = vunpack.c.l.b16 %v295
        %v499 = vunpack.c.l.b16 %v296
        %v500 = vunpack.c.l.b16 %v297
        %v501 = vunpack.c.l.b16 %v298
        %v502 = vunpack.c.l.b16 %v299
        %v503 = vunpack.c.l.b16 %v300
        %v504 = vunpack.c.l.b16 %v301
        %v505 = vunpack.c.l.b16 %v302
        %v506 = vunpack.c.l.b16 %v303
        %v507 = vunpack.c.l.b16 %v304
        %v508 = vunpack.c.l.b16 %v305
        %v509 = vunpack.c.l.b16 %v306
        %v510 = vunpack.c.l.b16 %v307
        %v511 = vunpack.c.l.b16 %v308
        %v512 = vunpack.c.l.b16 %v309
        %v513 = vunpack.c.l.b16 %v310
        %v514 = vunpack.c.l.b16 %v311
        %v515 = vunpack.c.l.b16 %v312
        %v516 = vunpack.c.l.b16 %v313
        %v517 = vunpack.c.l.b16 %v314
        %v518 = vunpack.c.l.b16 %v315
        %v519 = vunpack.c.l.b16 %v316
        %v520 = vunpack.c.l.b16 %v317
        %v521 = vunpack.c.l.b16 %v318
        %v522 = vunpack.c.l.b16 %v319
        %v523 = vunpack.c.l.b16 %v320
        %v524 = vunpack.c.l.b16 %v321
        %v525 = vunpack.c.l.b16 %v322
        %v526 = vunpack.c.l.b16 %v323
        %v527 = vunpack.c.l.b16 %v324
        %v528 = vunpack.c.l.b16 %v325
        %v529 = vunpack.c.l.b16 %v326
        %v530 = vunpack.c.l.b16 %v327
        %v531 = vunpack.c.l.b16 %v328
        %v532 = vunpack.c.l.b16 %v329
        %v533 = vunpack.c.l.b16 %v330
        %v534 = vunpack.c.l.b16 %v331
        %v535 = vunpack.c.l.b16 %v332
        %v536 = vunpack.c.l.b16 %v333
        %v537 = vunpack.c.l.b16 %v334
        %v538 = vunpack.c.l.b16 %v335
        %v539 = vpack.c.b16 %v442, %v441
        %v540 = vpack.c.b16 %v444, %v443
        %v541 = vpack.c.b16 %v446, %v445
        %v542 = vpack.c.b16 %v448, %v447
        %v543 = vpack.c.b16 %v450, %v449
        %v544 = vpack.c.b16 %v452, %v451
        %v545 = vpack.c.b16 %v454, %v453
        %v546 = vpack.c.b16 %v456, %v455
        %v547 = vpack.c.b16 %v458, %v457
        %v548 = vpack.c.b16 %v460, %v459
        %v549 = vpack.c.b16 %v462, %v461
        %v550 = vpack.c.b16 %v464, %v463
        %v551 = vpack.c.b16 %v466, %v465
        %v552 = vpack.c.b16 %v468, %v467
        %v553 = vpack.c.b16 %v470, %v469
        %v554 = vpack.c.b16 %v472, %v471
        %v555 = vpack.c.b16 %v474, %v473
        %v556 = vpack.c.b16 %v476, %v475
        %v557 = vpack.c.b16 %v478, %v477
        %v558 = vpack.c.b16 %v480, %v479
        %v559 = vpack.c.b16 %v482, %v481
        %v560 = vpack.c.b16 %v484, %v483
        %v561 = vpack.c.b16 %v486, %v485
        %v562 = vpack.c.b16 %v488, %v487
        %v563 = vpack.c.b16 %v490, %v489
        %v564 = vpack.c.b16 %v492, %v491
        %v565 = vpack.c.b16 %v494, %v493
        %v566 = vpack.c.b16 %v496, %v495
        %v567 = vpack.c.b16 %v498, %v497
        %v568 = vpack.c.b16 %v500, %v499
        %v569 = vpack.c.b16 %v502, %v501
        %v570 = vpack.c.b16 %v504, %v503
        %v571 = vpack.c.b16 %v506, %v505
        %v572 = vpack.c.b16 %v508, %v507
        %v573 = vpack.c.b16 %v510, %v509
        %v574 = vpack.c.b16 %v512, %v511
        %v575 = vpack.c.b16 %v514, %v513
        %v576 = vpack.c.b16 %v516, %v515
        %v577 = vpack.c.b16 %v518, %v517
        %v578 = vpack.c.b16 %v520, %v519
        %v579 = vpack.c.b16 %v522, %v521
        %v580 = vpack.c.b16 %v524, %v523
        %v581 = vpack.c.b16 %v526, %v525
        %v582 = vpack.c.b16 %v528, %v527
        %v583 = vpack.c.b16 %v530, %v529
        %v584 = vpack.c.b16 %v532, %v531
        %v585 = vpack.c.b16 %v534, %v533
        %v586 = vpack.c.b16 %v536, %v535
        %v587 = vpack.c.b16 %v538, %v537
        %vm637 = vcmask 130048
        %v639 = vsel %vm637, %v237, 0
        %641 = vmatprep.subr.bf16.mxu0 0
        %642 = vmatpush1.bf16.msra.mxu0 %v539
        %643 = vmatprep.subr.bf16.mxu0 0
        %644 = vmatpush1.bf16.msra.mxu0 %v540
        %645 = vmatprep.subr.bf16.mxu0 0
        %646 = vmatpush1.bf16.msra.mxu0 %v541
        %647 = vmatprep.subr.bf16.mxu0 0
        %648 = vmatpush1.bf16.msra.mxu0 %v542
        %649 = vmatprep.subr.bf16.mxu0 0
        %650 = vmatpush1.bf16.msra.mxu0 %v543
        %651 = vmatprep.subr.bf16.mxu0 0
        %652 = vmatpush1.bf16.msra.mxu0 %v544
        %653 = vmatprep.subr.bf16.mxu0 0
        %654 = vmatpush1.bf16.msra.mxu0 %v545
        %655 = vmatprep.subr.bf16.mxu0 0
        %656 = vmatpush1.bf16.msra.mxu0 %v546
        %657 = vmatprep.subr.bf16.mxu0 0
        %658 = vmatpush1.bf16.msra.mxu0 %v547
        %659 = vmatprep.subr.bf16.mxu0 0
        %660 = vmatpush1.bf16.msra.mxu0 %v548
        %661 = vmatprep.subr.bf16.mxu0 0
        %662 = vmatpush1.bf16.msra.mxu0 %v549
        %663 = vmatprep.subr.bf16.mxu0 0
        %664 = vmatpush1.bf16.msra.mxu0 %v550
        %665 = vmatprep.subr.bf16.mxu0 0
        %666 = vmatpush1.bf16.msra.mxu0 %v551
        %667 = vmatprep.subr.bf16.mxu0 0
        %668 = vmatpush1.bf16.msra.mxu0 %v552
        %669 = vmatprep.subr.bf16.mxu0 0
        %670 = vmatpush1.bf16.msra.mxu0 %v553
        %671 = vmatprep.subr.bf16.mxu0 0
        %672 = vmatpush1.bf16.msra.mxu0 %v554
        %673 = vmatprep.mubr.bf16.mxu0 %v232
        %674 = vmatmul.mubr.bf16.gmra.mrb[0].mxu0 %v231
        %v675 = vpop.f32.mrb[0].mxu0
        %v676 = vadd.f32 %v341, %v675
        %v677 = vpop.f32.mrb[0].mxu0
        %v678 = vpop.f32.mrb[0].mxu0
        %v679 = vpop.f32.mrb[0].mxu0
        %680 = vdwg.mxu0
        %681 = vmatprep.subr.bf16.mxu0 0
        %682 = vmatpush1.bf16.msra.mxu0 %v555
        %683 = vmatprep.subr.bf16.mxu0 0
        %684 = vmatpush1.bf16.msra.mxu0 %v556
        %685 = vmatprep.subr.bf16.mxu0 0
        %686 = vmatpush1.bf16.msra.mxu0 %v557
        %687 = vmatprep.subr.bf16.mxu0 0
        %688 = vmatpush1.bf16.msra.mxu0 %v558
        %689 = vmatprep.subr.bf16.mxu0 0
        %690 = vmatpush1.bf16.msra.mxu0 %v559
        %691 = vmatprep.subr.bf16.mxu0 0
        %692 = vmatpush1.bf16.msra.mxu0 %v560
        %693 = vmatprep.subr.bf16.mxu0 0
        %694 = vmatpush1.bf16.msra.mxu0 %v561
        %695 = vmatprep.subr.bf16.mxu0 0
        %696 = vmatpush1.bf16.msra.mxu0 %v562
        %697 = vmatprep.subr.bf16.mxu0 0
        %698 = vmatpush1.bf16.msra.mxu0 %v563
        %699 = vmatprep.subr.bf16.mxu0 0
        %700 = vmatpush1.bf16.msra.mxu0 %v564
        %701 = vmatprep.subr.bf16.mxu0 0
        %702 = vmatpush1.bf16.msra.mxu0 %v565
        %703 = vmatprep.subr.bf16.mxu0 0
        %704 = vmatpush1.bf16.msra.mxu0 %v566
        %705 = vmatprep.subr.bf16.mxu0 0
        %706 = vmatpush1.bf16.msra.mxu0 %v567
        %707 = vmatprep.subr.bf16.mxu0 0
        %708 = vmatpush1.bf16.msra.mxu0 %v568
        %709 = vmatprep.subr.bf16.mxu0 0
        %710 = vmatpush1.bf16.msra.mxu0 %v569
        %711 = vmatprep.subr.bf16.mxu0 0
        %712 = vmatpush1.bf16.msra.mxu0 %v570
        %713 = vmatprep.mubr.bf16.mxu0 %v234
        %714 = vmatmul.mubr.bf16.gmra.mrb[0].mxu0 %v233
        %v715 = vpop.f32.mrb[0].mxu0
        %v716 = vadd.f32 %v676, %v715
        %v717 = vpop.f32.mrb[0].mxu0
        %v718 = vpop.f32.mrb[0].mxu0
        %v719 = vpop.f32.mrb[0].mxu0
        %720 = vdwg.mxu0
        %721 = vmatprep.subr.bf16.mxu0 0
        %722 = vmatpush1.bf16.msra.mxu0 %v571
        %723 = vmatprep.subr.bf16.mxu0 0
        %724 = vmatpush1.bf16.msra.mxu0 %v572
        %725 = vmatprep.subr.bf16.mxu0 0
        %726 = vmatpush1.bf16.msra.mxu0 %v573
        %727 = vmatprep.subr.bf16.mxu0 0
        %728 = vmatpush1.bf16.msra.mxu0 %v574
        %729 = vmatprep.subr.bf16.mxu0 0
        %730 = vmatpush1.bf16.msra.mxu0 %v575
        %731 = vmatprep.subr.bf16.mxu0 0
        %732 = vmatpush1.bf16.msra.mxu0 %v576
        %733 = vmatprep.subr.bf16.mxu0 0
        %734 = vmatpush1.bf16.msra.mxu0 %v577
        %735 = vmatprep.subr.bf16.mxu0 0
        %736 = vmatpush1.bf16.msra.mxu0 %v578
        %737 = vmatprep.subr.bf16.mxu0 0
        %738 = vmatpush1.bf16.msra.mxu0 %v579
        %739 = vmatprep.subr.bf16.mxu0 0
        %740 = vmatpush1.bf16.msra.mxu0 %v580
        %741 = vmatprep.subr.bf16.mxu0 0
        %742 = vmatpush1.bf16.msra.mxu0 %v581
        %743 = vmatprep.subr.bf16.mxu0 0
        %744 = vmatpush1.bf16.msra.mxu0 %v582
        %745 = vmatprep.subr.bf16.mxu0 0
        %746 = vmatpush1.bf16.msra.mxu0 %v583
        %747 = vmatprep.subr.bf16.mxu0 0
        %748 = vmatpush1.bf16.msra.mxu0 %v584
        %749 = vmatprep.subr.bf16.mxu0 0
        %750 = vmatpush1.bf16.msra.mxu0 %v585
        %751 = vmatprep.subr.bf16.mxu0 0
        %752 = vmatpush1.bf16.msra.mxu0 %v586
        %753 = vmatprep.mubr.bf16.mxu0 %v236
        %754 = vmatmul.mubr.bf16.gmra.mrb[0].mxu0 %v235
        %v755 = vpop.f32.mrb[0].mxu0
        %v756 = vadd.f32 %v716, %v755
        %v757 = vpop.f32.mrb[0].mxu0
        %v758 = vpop.f32.mrb[0].mxu0
        %v759 = vpop.f32.mrb[0].mxu0
        %760 = vdwg.mxu0
        %761 = vmatprep.subr.bf16.mxu0 0
        %762 = vmatpush1.bf16.msra.mxu0 %v587
        %763 = vmatprep.subr.bf16.mxu0 0
        %764 = vmatpush1.bf16.msra.mxu0 0
        %765 = vmatprep.subr.bf16.mxu0 0
        %766 = vmatpush1.bf16.msra.mxu0 0
        %767 = vmatprep.subr.bf16.mxu0 0
        %768 = vmatpush1.bf16.msra.mxu0 0
        %769 = vmatprep.subr.bf16.mxu0 0
        %770 = vmatpush1.bf16.msra.mxu0 0
        %771 = vmatprep.subr.bf16.mxu0 0
        %772 = vmatpush1.bf16.msra.mxu0 0
        %773 = vmatprep.subr.bf16.mxu0 0
        %774 = vmatpush1.bf16.msra.mxu0 0
        %775 = vmatprep.subr.bf16.mxu0 0
        %776 = vmatpush1.bf16.msra.mxu0 0
        %777 = vmatprep.subr.bf16.mxu0 0
        %778 = vmatpush1.bf16.msra.mxu0 0
        %779 = vmatprep.subr.bf16.mxu0 0
        %780 = vmatpush1.bf16.msra.mxu0 0
        %781 = vmatprep.subr.bf16.mxu0 0
        %782 = vmatpush1.bf16.msra.mxu0 0
        %783 = vmatprep.subr.bf16.mxu0 0
        %784 = vmatpush1.bf16.msra.mxu0 0
        %785 = vmatprep.subr.bf16.mxu0 0
        %786 = vmatpush1.bf16.msra.mxu0 0
        %787 = vmatprep.subr.bf16.mxu0 0
        %788 = vmatpush1.bf16.msra.mxu0 0
        %789 = vmatprep.subr.bf16.mxu0 0
        %790 = vmatpush1.bf16.msra.mxu0 0
        %791 = vmatprep.subr.bf16.mxu0 0
        %792 = vmatpush1.bf16.msra.mxu0 0
        %793 = vmatprep.mubr.bf16.mxu0 0
        %794 = vmatmul.mubr.bf16.gmra.mrb[0].mxu0 %v639
        %v795 = vpop.f32.mrb[0].mxu0
        %v796 = vadd.f32 %v756, %v795
        %v797 = vpop.f32.mrb[0].mxu0
        %v798 = vpop.f32.mrb[0].mxu0
        %v799 = vpop.f32.mrb[0].mxu0
        %800 = vdwg.mxu0
        %v801 = vmax.f32 %v796, 0.0
        %v802 = vpack.c.bf16 %v801, %v801
        %v803 = vld [vmem:[%s3] sm:$0xf]
        %v804 = vld [vmem:[%s3 + $0x4] sm:$0xf]
        %v805 = vld [vmem:[%s3 + $0x8] sm:$0xf]
        %v806 = vld [vmem:[%s3 + $0xc] sm:$0xf]
        %v807 = vld [vmem:[%s3 + $0x10] sm:$0xf]
        %v808 = vld [vmem:[%s3 + $0x14] sm:$0xf]
        %v809 = vld [vmem:[%s3 + $0x18] sm:$0xf]
        %v810 = vld [vmem:[%s3 + $0x1c] sm:$0xf]
        %v811 = vld [vmem:[%s3 + $0x20] sm:$0xf]
        %v812 = vld [vmem:[%s3 + $0x24] sm:$0xf]
        %v813 = vld [vmem:[%s3 + $0x28] sm:$0xf]
        %v814 = vld [vmem:[%s3 + $0x2c] sm:$0xf]
        %v815 = vld [vmem:[%s3 + $0x30] sm:$0xf]
        %v816 = vld [vmem:[%s3 + $0x34] sm:$0xf]
        %v817 = vld [vmem:[%s3 + $0x38] sm:$0xf]
        %v818 = vld [vmem:[%s3 + $0x3c] sm:$0xf]
        %v835 = vunpack.c.l.b16 %v803
        %v836 = vunpack.c.l.b16 %v804
        %v837 = vunpack.c.l.b16 %v805
        %v838 = vunpack.c.l.b16 %v806
        %v839 = vunpack.c.l.b16 %v807
        %v840 = vunpack.c.l.b16 %v808
        %v841 = vunpack.c.l.b16 %v809
        %v842 = vunpack.c.l.b16 %v810
        %v843 = vunpack.c.l.b16 %v811
        %v844 = vunpack.c.l.b16 %v812
        %v845 = vunpack.c.l.b16 %v813
        %v846 = vunpack.c.l.b16 %v814
        %v847 = vunpack.c.l.b16 %v815
        %v848 = vunpack.c.l.b16 %v816
        %v849 = vunpack.c.l.b16 %v817
        %v850 = vunpack.c.l.b16 %v818
        %v851 = vpack.c.b16 %v836, %v835
        %v852 = vpack.c.b16 %v838, %v837
        %v853 = vpack.c.b16 %v840, %v839
        %v854 = vpack.c.b16 %v842, %v841
        %v855 = vpack.c.b16 %v844, %v843
        %v856 = vpack.c.b16 %v846, %v845
        %v857 = vpack.c.b16 %v848, %v847
        %v858 = vpack.c.b16 %v850, %v849
        %867 = vmatprep.subr.bf16.mxu0 0
        %868 = vmatpush1.bf16.msra.mxu0 %v851
        %869 = vmatprep.subr.bf16.mxu0 0
        %870 = vmatpush1.bf16.msra.mxu0 %v852
        %871 = vmatprep.subr.bf16.mxu0 0
        %872 = vmatpush1.bf16.msra.mxu0 %v853
        %873 = vmatprep.subr.bf16.mxu0 0
        %874 = vmatpush1.bf16.msra.mxu0 %v854
        %875 = vmatprep.subr.bf16.mxu0 0
        %876 = vmatpush1.bf16.msra.mxu0 %v855
        %877 = vmatprep.subr.bf16.mxu0 0
        %878 = vmatpush1.bf16.msra.mxu0 %v856
        %879 = vmatprep.subr.bf16.mxu0 0
        %880 = vmatpush1.bf16.msra.mxu0 %v857
        %881 = vmatprep.subr.bf16.mxu0 0
        %882 = vmatpush1.bf16.msra.mxu0 %v858
        %883 = vmatprep.subr.bf16.mxu0 0
        %884 = vmatpush1.bf16.msra.mxu0 0
        %885 = vmatprep.subr.bf16.mxu0 0
        %886 = vmatpush1.bf16.msra.mxu0 0
        %887 = vmatprep.subr.bf16.mxu0 0
        %888 = vmatpush1.bf16.msra.mxu0 0
        %889 = vmatprep.subr.bf16.mxu0 0
        %890 = vmatpush1.bf16.msra.mxu0 0
        %891 = vmatprep.subr.bf16.mxu0 0
        %892 = vmatpush1.bf16.msra.mxu0 0
        %893 = vmatprep.subr.bf16.mxu0 0
        %894 = vmatpush1.bf16.msra.mxu0 0
        %895 = vmatprep.subr.bf16.mxu0 0
        %896 = vmatpush1.bf16.msra.mxu0 0
        %897 = vmatprep.subr.bf16.mxu0 0
        %898 = vmatpush1.bf16.msra.mxu0 0
        %899 = vmatprep.mubr.bf16.mxu0 0
        %900 = vmatmul.mubr.bf16.gmra.mrb[0].mxu0 %v802
        %v901 = vpop.f32.mrb[0].mxu0
        %v902 = vadd.f32 0.0, %v901
        %v903 = vpop.f32.mrb[0].mxu0
        %v904 = vpop.f32.mrb[0].mxu0
        %v905 = vpop.f32.mrb[0].mxu0
        %906 = vdwg.mxu0
        %v907 = vld [vmem:[%s4] sm:$0x1]
        %v909 = vlaneseq
        %v910 = vshrl.u32 %v909, 7
        %v911 = vsub.s32 0, %v910
        %v912 = vrot.slane %v907, %v911
        %v914 = vadd.f32 %v902, %v912
        %vm915 = vcmask 80896
        %916 = vst.msk [vmem:[%s217] sm:$0xff] %vm915, %v914
        %s917 = sand.u32 %s137, 1
        %s918 = scalar_lea.sflag [#allocation3], %s917
        %s919 = sand.u32 %s137, 1
        %s920 = smul.addr %s919, 8
        %s921 = scalar_lea.vmem [#allocation2], %s920
        // Predicated region
        $region41: #{mlp_forward.1} parent=39 // pred_check
          %p922 = pneg %p147
        $region42: #{mlp_forward.1} parent=39 // pred_check_branch
          %924 = sbr.rel (%p922) target = $region44
        $region43: #{mlp_forward.1} parent=39 // pred_region
          %s926 = ssub.s32 128, 128
          %927 = vsyncadd %s918, %s926
          %s928 = smul.addr %s19, 128
          %s929 = scalar_lea.hbm %s5, %s928
          %s931 = sshll.u32 %s921, 4
          %s932 = int_to_ptr.vmem [resolvable:$true] %s931
          %934 = dma.vmem_to_hbm [thread:$0]  %s932, 128, %s929, %s918
        $region44: #{mlp_forward.1} parent=39 // pred_fallthru
          _
      $region40: #{mlp_forward.1} parent=5 // pred_fallthru
        _
      %p935 = scmp.le.s32.totalorder 2, %s14
      // Predicated region
      $region45: #{mlp_forward.1} parent=5 // pred_check
        %p936 = pneg %p935
      $region46: #{mlp_forward.1} parent=5 // pred_check_branch
        %938 = sbr.rel (%p936) target = $region48
      $region47: #{mlp_forward.1} parent=5 // pred_region
        %s939 = ssub.s32 %s14, 2
        // Predicated region
        $region49: #{mlp_forward.1} parent=47 // pred_check
          %p940 = pneg %p153
        $region50: #{mlp_forward.1} parent=47 // pred_check_branch
          %942 = sbr.rel (%p940) target = $region52
        $region51: #{mlp_forward.1} parent=47 // pred_region
          %s943 = sand.u32 %s138, 1
          %s944 = scalar_lea.sflag [#allocation3], %s943
          %s945 = sand.u32 %s138, 1
          %s946 = smul.addr %s945, 8
          %s947 = scalar_lea.vmem [#allocation2], %s946
          %948 = dma.done %s944, 128
        $region52: #{mlp_forward.1} parent=47 // pred_fallthru
          _
      $region48: #{mlp_forward.1} parent=5 // pred_fallthru
        _
    $region6: #{mlp_forward.1} parent=1 // loop_footer
      %s18 = sadd.s32 1, %s14
    $region7: #{mlp_forward.1} parent=1 // loop_footer_branch
      %13 = sbr.rel target = $region3
    $region8: #{mlp_forward.1} parent=1 // loop_exit
      _
    %949 = vsyncpa [#allocation3], 1
    %s950 = scalar_lea.sflag [#allocation3], 1
    %951 = vsyncpa %s950, 1

</llo_original>
